<compile_context>
chip_gen: v5e
topology: v5e:2x2
jax: 0.10.0
libtpu: 0.0.40
codegen_flags: <defaults>
</compile_context>

<pallas_src>
import jax
import jax.numpy as jnp
from jax.experimental import pallas as pl
from jax.experimental.pallas import tpu as pltpu

IN_FEATURES = 1024
OUT_PAD = 8            # 1 cls + 4 reg + 3 zero-pad columns


def _roi_kernel(x_ref, w_ref, b_ref, o_ref):
    # x_ref: (TM, 1024) f32, w_ref: (1024, 8) bf16, b_ref: (1, 8) f32, o_ref: (TM, 8) f32
    x_bf16 = x_ref[...].astype(jnp.bfloat16)          # VPU cast; keeps HBM read at f32 only
    acc = jnp.dot(x_bf16, w_ref[...], preferred_element_type=jnp.float32)
    o_ref[...] = acc + b_ref[...]


def fuse_params(w_cls, b_cls, w_reg, b_reg):
    """Fuse the two PyTorch-style Linear params into one (in, OUT_PAD) slab. Do this ONCE."""
    w_full = jnp.zeros((IN_FEATURES, OUT_PAD), jnp.float32)
    w_full = w_full.at[:, 0:1].set(w_cls.T)           # cls -> column 0
    w_full = w_full.at[:, 1:5].set(w_reg.T)           # reg -> columns 1..4
    b_full = jnp.zeros((1, OUT_PAD), jnp.float32)
    b_full = b_full.at[0, 0:1].set(b_cls)
    b_full = b_full.at[0, 1:5].set(b_reg)
    return w_full.astype(jnp.bfloat16), b_full        # bf16 weights, f32 bias


def roi_forward(x, w_full, b_full, *, tm=512):
    """x: (B, C, H, W) with C*H*W == 1024. Returns (cls, reg) of shapes (B, 1), (B, 4)."""
    B = x.shape[0]
    x_flat = x.reshape(B, -1)                          # contiguous reshape: metadata only
    assert x_flat.shape[1] == IN_FEATURES
    x_flat = x_flat.astype(jnp.float32)

    if B <= tm:
        # Single tile; a full-array block is exempt from the (8,128) divisibility rule.
        tm_eff, b_pad = B, B
    else:
        tm_eff = tm
        b_pad = pl.cdiv(B, tm) * tm
        if b_pad != B:
            x_flat = jnp.pad(x_flat, ((0, b_pad - B), (0, 0)))

    grid = (b_pad // tm_eff,)
    bytes_accessed = (b_pad * IN_FEATURES * 4          # f32 activations
                      + IN_FEATURES * OUT_PAD * 2      # bf16 weight slab
                      + OUT_PAD * 4                    # f32 bias
                      + b_pad * OUT_PAD * 4)           # f32 output

    out = pl.pallas_call(
        _roi_kernel,
        out_shape=jax.ShapeDtypeStruct((b_pad, OUT_PAD), jnp.float32),
        grid=grid,
        in_specs=[
            pl.BlockSpec((tm_eff, IN_FEATURES), lambda i: (i, 0)),   # batch-tiled activations
            pl.BlockSpec((IN_FEATURES, OUT_PAD), lambda i: (0, 0)),  # weight slab stays resident
            pl.BlockSpec((1, OUT_PAD), lambda i: (0, 0)),            # bias stays resident
        ],
        out_specs=pl.BlockSpec((tm_eff, OUT_PAD), lambda i: (i, 0)),
        compiler_params=pltpu.CompilerParams(
            dimension_semantics=("parallel",)),                      # lights up both v7x TCs
        cost_estimate=pl.CostEstimate(
            flops=2 * b_pad * IN_FEATURES * OUT_PAD,
            transcendentals=0,
            bytes_accessed=bytes_accessed),
    )(x_flat, w_full, b_full)

    cls = out[:B, 0:1]
    reg = out[:B, 1:5]
    return cls, reg


def init_params(key):
    # Deterministic init mimicking torch.nn.Linear default: U(-1/sqrt(in), 1/sqrt(in)).
    k1, k2, k3, k4 = jax.random.split(key, 4)
    bound = 1.0 / jnp.sqrt(jnp.float32(IN_FEATURES))
    w_cls = jax.random.uniform(k1, (1, IN_FEATURES), jnp.float32, -bound, bound)
    b_cls = jax.random.uniform(k2, (1,), jnp.float32, -bound, bound)
    w_reg = jax.random.uniform(k3, (4, IN_FEATURES), jnp.float32, -bound, bound)
    b_reg = jax.random.uniform(k4, (4,), jnp.float32, -bound, bound)
    return w_cls, b_cls, w_reg, b_reg


if __name__ == "__main__":
    key = jax.random.PRNGKey(0)
    k_x, k_p = jax.random.split(key)

    # (B, C, H, W) = (2, 4, 16, 16) -> flattens to (2, 1024)
    x = jax.random.normal(k_x, (2, 4, 16, 16), jnp.float32)
    w_cls, b_cls, w_reg, b_reg = init_params(k_p)

    # Fuse once, outside the jitted forward (no per-call slab construction).
    w_full, b_full = fuse_params(w_cls, b_cls, w_reg, b_reg)

    fwd = jax.jit(roi_forward)
    cls, reg = fwd(x, w_full, b_full)
    jax.block_until_ready((cls, reg))

    # Reference check in plain JAX (same math as the PyTorch module, f32).
    x_flat = x.reshape(2, -1)
    cls_ref = x_flat @ w_cls.T + b_cls
    reg_ref = x_flat @ w_reg.T + b_reg
    assert cls.shape == (2, 1) and reg.shape == (2, 4)
    # bf16 matmul inputs / f32 accumulate -> slightly looser tolerance than pure f32.
    assert jnp.allclose(cls, cls_ref, atol=5e-2, rtol=5e-2)
    assert jnp.allclose(reg, reg_ref, atol=5e-2, rtol=5e-2)

    print("KERNEL_OK")
</pallas_src>

<mosaic_0001>
module attributes {stable_mosaic.version = 11 : i64} {
  func.func @_roi_kernel(%arg0: i32, %arg1: memref<2x1024xf32, #tpu.memory_space<vmem>>, %arg2: memref<1024x8xbf16, #tpu.memory_space<vmem>>, %arg3: memref<1x8xf32, #tpu.memory_space<vmem>>, %arg4: memref<2x8xf32, #tpu.memory_space<vmem>>) attributes {dimension_semantics = [#tpu.dimension_semantics<parallel>], iteration_bounds = array<i64: 1>, scalar_prefetch = 0 : i64, scratch_operands = 0 : i64, tpu.core_type = #tpu.core_type<tc>, window_params = [{transform_indices = @transform_0, window_bounds = array<i64: 2, 1024>}, {pipeline_mode = #tpu.pipeline_mode<synchronous>, transform_indices = @transform_1, window_bounds = array<i64: 1024, 8>}, {pipeline_mode = #tpu.pipeline_mode<synchronous>, transform_indices = @transform_2, window_bounds = array<i64: 1, 8>}, {transform_indices = @transform_3, window_bounds = array<i64: 2, 8>}]} {
    %c0 = arith.constant 0 : index
    %c0_0 = arith.constant 0 : index
    %0 = vector.load %arg1[%c0, %c0_0] : memref<2x1024xf32, #tpu.memory_space<vmem>>, vector<2x1024xf32>
    %1 = arith.truncf %0 : vector<2x1024xf32> to vector<2x1024xbf16>
    %c0_1 = arith.constant 0 : index
    %c0_2 = arith.constant 0 : index
    %2 = vector.load %arg2[%c0_1, %c0_2] : memref<1024x8xbf16, #tpu.memory_space<vmem>>, vector<1024x8xbf16>
    %cst = arith.constant dense<0.000000e+00> : vector<2x8xf32>
    %3 = tpu.matmul %1, %2, %cst {dimension_numbers = #tpu.dot_dimension_numbers<[1], [0], [0], [1], [0, 0, 1, 1], [], []>} : vector<2x1024xbf16>, vector<1024x8xbf16>, vector<2x8xf32> -> vector<2x8xf32>
    %c0_3 = arith.constant 0 : index
    %c0_4 = arith.constant 0 : index
    %4 = vector.load %arg3[%c0_3, %c0_4] : memref<1x8xf32, #tpu.memory_space<vmem>>, vector<1x8xf32>
    %5 = vector.broadcast %4 : vector<1x8xf32> to vector<2x8xf32>
    %6 = arith.addf %3, %5 : vector<2x8xf32>
    %c0_5 = arith.constant 0 : index
    %c0_6 = arith.constant 0 : index
    %7 = vector.load %arg4[%c0_5, %c0_6] : memref<2x8xf32, #tpu.memory_space<vmem>>, vector<2x8xf32>
    tpu.vector_store %arg4[%c0_5, %c0_6], %6 {strides = array<i32>} : memref<2x8xf32, #tpu.memory_space<vmem>>, vector<2x8xf32>,
    return
  }
  func.func @transform_0(%arg0: i32) -> (i32, i32) {
    %c0_i32 = arith.constant 0 : i32
    %c0_i32_0 = arith.constant 0 : i32
    return %arg0, %c0_i32 : i32, i32
  }
  func.func @transform_1(%arg0: i32) -> (i32, i32) {
    %c0_i32 = arith.constant 0 : i32
    %c0_i32_0 = arith.constant 0 : i32
    %c0_i32_1 = arith.constant 0 : i32
    return %c0_i32, %c0_i32_0 : i32, i32
  }
  func.func @transform_2(%arg0: i32) -> (i32, i32) {
    %c0_i32 = arith.constant 0 : i32
    %c0_i32_0 = arith.constant 0 : i32
    %c0_i32_1 = arith.constant 0 : i32
    return %c0_i32, %c0_i32_0 : i32, i32
  }
  func.func @transform_3(%arg0: i32) -> (i32, i32) {
    %c0_i32 = arith.constant 0 : i32
    %c0_i32_0 = arith.constant 0 : i32
    return %arg0, %c0_i32 : i32, i32
  }
}

</mosaic_0001>

<llo_original>
// kernel: roi_forward.1
$region0: #{roi_forward.1}
  #allocation0 [shape = 'u32[]', space=smem, size = 0x4, offset = 0x4, fixed_abs, tag = 'smem constant byte address 0x4 - core index']
  #allocation1 [shape = 'u32[72,128]{1,0:T(1,128)}', space=vmem, size = 0x9000, scoped, tag = 'internal scratch']
  %s0 = inlined_call_operand.vmem [shape: f32[2,1024], index: 0, kind: input, shape index: {}]
  %s1 = inlined_call_operand.vmem [shape: bf16[1024,8], index: 1, kind: input, shape index: {}]
  %s2 = inlined_call_operand.vmem [shape: f32[1,8], index: 2, kind: input, shape index: {}]
  %s3 = inlined_call_operand.vmem [shape: f32[2,8], index: 3, kind: output, shape index: {}]
  %s4 = sld [smem:[#allocation0]]
  $region22: #{roi_forward.1} parent=0
    _
  %s6 = ssub.s32 1, %s4
  %s7 = scalar_select 0, %s6, %s4
  // Predicated region
  $region2: #{roi_forward.1} parent=0 // pred_check
    _
  $region3: #{roi_forward.1} parent=0 // pred_check_branch
    %9 = sbr.rel (0) target = $region5
  $region4: #{roi_forward.1} parent=0 // pred_region
    _
  $region5: #{roi_forward.1} parent=0 // pred_fallthru
    _
  // Predicated region
  $region6: #{roi_forward.1} parent=0 // pred_check
    _
  $region7: #{roi_forward.1} parent=0 // pred_check_branch
    %11 = sbr.rel (0) target = $region9
  $region8: #{roi_forward.1} parent=0 // pred_region
    _
  $region9: #{roi_forward.1} parent=0 // pred_fallthru
    _
  // Predicated region
  $region10: #{roi_forward.1} parent=0 // pred_check
    _
  $region11: #{roi_forward.1} parent=0 // pred_check_branch
    %13 = sbr.rel (0) target = $region13
  $region12: #{roi_forward.1} parent=0 // pred_region
    _
  $region13: #{roi_forward.1} parent=0 // pred_fallthru
    _
  %v14 = vld [vmem:[%s0] sm:$0xff]
  %v15 = vld [vmem:[%s0 + $0x8] sm:$0xff]
  %18 = vst [vmem:[#allocation1] ss:$4 sm:$0xff] %v14
  %s19 = scalar_lea.vmem [#allocation1], 32
  %20 = vst [vmem:[%s19] ss:$4 sm:$0xff] %v15
  %v21 = vld.sshfl [vmem:[#allocation1] sm:$0xff pattern:$0x73625140]
  %v22 = vld.sshfl [vmem:[#allocation1 + $0x8] sm:$0xff pattern:$0x73625140]
  %v23 = vld.sshfl [vmem:[#allocation1 + $0x10] sm:$0xff pattern:$0x73625140]
  %v24 = vld.sshfl [vmem:[#allocation1 + $0x18] sm:$0xff pattern:$0x73625140]
  %v25 = vld.sshfl [vmem:[#allocation1 + $0x20] sm:$0xff pattern:$0x73625140]
  %v26 = vld.sshfl [vmem:[#allocation1 + $0x28] sm:$0xff pattern:$0x73625140]
  %v27 = vld.sshfl [vmem:[#allocation1 + $0x30] sm:$0xff pattern:$0x73625140]
  %v28 = vld.sshfl [vmem:[#allocation1 + $0x38] sm:$0xff pattern:$0x73625140]
  %v37 = vpack.c.bf16 %v21, %v21
  %v38 = vpack.c.bf16 %v22, %v22
  %v39 = vpack.c.bf16 %v23, %v23
  %v40 = vpack.c.bf16 %v24, %v24
  %v41 = vpack.c.bf16 %v25, %v25
  %v42 = vpack.c.bf16 %v26, %v26
  %v43 = vpack.c.bf16 %v27, %v27
  %v44 = vpack.c.bf16 %v28, %v28
  %v45 = vld [vmem:[%s1] sm:$0xf]
  %v46 = vld [vmem:[%s1 + $0x4] sm:$0xf]
  %v47 = vld [vmem:[%s1 + $0x8] sm:$0xf]
  %v48 = vld [vmem:[%s1 + $0xc] sm:$0xf]
  %v49 = vld [vmem:[%s1 + $0x10] sm:$0xf]
  %v50 = vld [vmem:[%s1 + $0x14] sm:$0xf]
  %v51 = vld [vmem:[%s1 + $0x18] sm:$0xf]
  %v52 = vld [vmem:[%s1 + $0x1c] sm:$0xf]
  %v53 = vld [vmem:[%s1 + $0x20] sm:$0xf]
  %v54 = vld [vmem:[%s1 + $0x24] sm:$0xf]
  %v55 = vld [vmem:[%s1 + $0x28] sm:$0xf]
  %v56 = vld [vmem:[%s1 + $0x2c] sm:$0xf]
  %v57 = vld [vmem:[%s1 + $0x30] sm:$0xf]
  %v58 = vld [vmem:[%s1 + $0x34] sm:$0xf]
  %v59 = vld [vmem:[%s1 + $0x38] sm:$0xf]
  %v60 = vld [vmem:[%s1 + $0x3c] sm:$0xf]
  %v61 = vld [vmem:[%s1 + $0x40] sm:$0xf]
  %v62 = vld [vmem:[%s1 + $0x44] sm:$0xf]
  %v63 = vld [vmem:[%s1 + $0x48] sm:$0xf]
  %v64 = vld [vmem:[%s1 + $0x4c] sm:$0xf]
  %v65 = vld [vmem:[%s1 + $0x50] sm:$0xf]
  %v66 = vld [vmem:[%s1 + $0x54] sm:$0xf]
  %v67 = vld [vmem:[%s1 + $0x58] sm:$0xf]
  %v68 = vld [vmem:[%s1 + $0x5c] sm:$0xf]
  %v69 = vld [vmem:[%s1 + $0x60] sm:$0xf]
  %v70 = vld [vmem:[%s1 + $0x64] sm:$0xf]
  %v71 = vld [vmem:[%s1 + $0x68] sm:$0xf]
  %v72 = vld [vmem:[%s1 + $0x6c] sm:$0xf]
  %v73 = vld [vmem:[%s1 + $0x70] sm:$0xf]
  %v74 = vld [vmem:[%s1 + $0x74] sm:$0xf]
  %v75 = vld [vmem:[%s1 + $0x78] sm:$0xf]
  %v76 = vld [vmem:[%s1 + $0x7c] sm:$0xf]
  %v77 = vld [vmem:[%s1 + $0x80] sm:$0xf]
  %v78 = vld [vmem:[%s1 + $0x84] sm:$0xf]
  %v79 = vld [vmem:[%s1 + $0x88] sm:$0xf]
  %v80 = vld [vmem:[%s1 + $0x8c] sm:$0xf]
  %v81 = vld [vmem:[%s1 + $0x90] sm:$0xf]
  %v82 = vld [vmem:[%s1 + $0x94] sm:$0xf]
  %v83 = vld [vmem:[%s1 + $0x98] sm:$0xf]
  %v84 = vld [vmem:[%s1 + $0x9c] sm:$0xf]
  %v85 = vld [vmem:[%s1 + $0xa0] sm:$0xf]
  %v86 = vld [vmem:[%s1 + $0xa4] sm:$0xf]
  %v87 = vld [vmem:[%s1 + $0xa8] sm:$0xf]
  %v88 = vld [vmem:[%s1 + $0xac] sm:$0xf]
  %v89 = vld [vmem:[%s1 + $0xb0] sm:$0xf]
  %v90 = vld [vmem:[%s1 + $0xb4] sm:$0xf]
  %v91 = vld [vmem:[%s1 + $0xb8] sm:$0xf]
  %v92 = vld [vmem:[%s1 + $0xbc] sm:$0xf]
  %v93 = vld [vmem:[%s1 + $0xc0] sm:$0xf]
  %v94 = vld [vmem:[%s1 + $0xc4] sm:$0xf]
  %v95 = vld [vmem:[%s1 + $0xc8] sm:$0xf]
  %v96 = vld [vmem:[%s1 + $0xcc] sm:$0xf]
  %v97 = vld [vmem:[%s1 + $0xd0] sm:$0xf]
  %v98 = vld [vmem:[%s1 + $0xd4] sm:$0xf]
  %v99 = vld [vmem:[%s1 + $0xd8] sm:$0xf]
  %v100 = vld [vmem:[%s1 + $0xdc] sm:$0xf]
  %v101 = vld [vmem:[%s1 + $0xe0] sm:$0xf]
  %v102 = vld [vmem:[%s1 + $0xe4] sm:$0xf]
  %v103 = vld [vmem:[%s1 + $0xe8] sm:$0xf]
  %v104 = vld [vmem:[%s1 + $0xec] sm:$0xf]
  %v105 = vld [vmem:[%s1 + $0xf0] sm:$0xf]
  %v106 = vld [vmem:[%s1 + $0xf4] sm:$0xf]
  %v107 = vld [vmem:[%s1 + $0xf8] sm:$0xf]
  %v108 = vld [vmem:[%s1 + $0xfc] sm:$0xf]
  %v109 = vld [vmem:[%s1 + $0x100] sm:$0xf]
  %v110 = vld [vmem:[%s1 + $0x104] sm:$0xf]
  %v111 = vld [vmem:[%s1 + $0x108] sm:$0xf]
  %v112 = vld [vmem:[%s1 + $0x10c] sm:$0xf]
  %v113 = vld [vmem:[%s1 + $0x110] sm:$0xf]
  %v114 = vld [vmem:[%s1 + $0x114] sm:$0xf]
  %v115 = vld [vmem:[%s1 + $0x118] sm:$0xf]
  %v116 = vld [vmem:[%s1 + $0x11c] sm:$0xf]
  %v117 = vld [vmem:[%s1 + $0x120] sm:$0xf]
  %v118 = vld [vmem:[%s1 + $0x124] sm:$0xf]
  %v119 = vld [vmem:[%s1 + $0x128] sm:$0xf]
  %v120 = vld [vmem:[%s1 + $0x12c] sm:$0xf]
  %v121 = vld [vmem:[%s1 + $0x130] sm:$0xf]
  %v122 = vld [vmem:[%s1 + $0x134] sm:$0xf]
  %v123 = vld [vmem:[%s1 + $0x138] sm:$0xf]
  %v124 = vld [vmem:[%s1 + $0x13c] sm:$0xf]
  %v125 = vld [vmem:[%s1 + $0x140] sm:$0xf]
  %v126 = vld [vmem:[%s1 + $0x144] sm:$0xf]
  %v127 = vld [vmem:[%s1 + $0x148] sm:$0xf]
  %v128 = vld [vmem:[%s1 + $0x14c] sm:$0xf]
  %v129 = vld [vmem:[%s1 + $0x150] sm:$0xf]
  %v130 = vld [vmem:[%s1 + $0x154] sm:$0xf]
  %v131 = vld [vmem:[%s1 + $0x158] sm:$0xf]
  %v132 = vld [vmem:[%s1 + $0x15c] sm:$0xf]
  %v133 = vld [vmem:[%s1 + $0x160] sm:$0xf]
  %v134 = vld [vmem:[%s1 + $0x164] sm:$0xf]
  %v135 = vld [vmem:[%s1 + $0x168] sm:$0xf]
  %v136 = vld [vmem:[%s1 + $0x16c] sm:$0xf]
  %v137 = vld [vmem:[%s1 + $0x170] sm:$0xf]
  %v138 = vld [vmem:[%s1 + $0x174] sm:$0xf]
  %v139 = vld [vmem:[%s1 + $0x178] sm:$0xf]
  %v140 = vld [vmem:[%s1 + $0x17c] sm:$0xf]
  %v141 = vld [vmem:[%s1 + $0x180] sm:$0xf]
  %v142 = vld [vmem:[%s1 + $0x184] sm:$0xf]
  %v143 = vld [vmem:[%s1 + $0x188] sm:$0xf]
  %v144 = vld [vmem:[%s1 + $0x18c] sm:$0xf]
  %v145 = vld [vmem:[%s1 + $0x190] sm:$0xf]
  %v146 = vld [vmem:[%s1 + $0x194] sm:$0xf]
  %v147 = vld [vmem:[%s1 + $0x198] sm:$0xf]
  %v148 = vld [vmem:[%s1 + $0x19c] sm:$0xf]
  %v149 = vld [vmem:[%s1 + $0x1a0] sm:$0xf]
  %v150 = vld [vmem:[%s1 + $0x1a4] sm:$0xf]
  %v151 = vld [vmem:[%s1 + $0x1a8] sm:$0xf]
  %v152 = vld [vmem:[%s1 + $0x1ac] sm:$0xf]
  %v153 = vld [vmem:[%s1 + $0x1b0] sm:$0xf]
  %v154 = vld [vmem:[%s1 + $0x1b4] sm:$0xf]
  %v155 = vld [vmem:[%s1 + $0x1b8] sm:$0xf]
  %v156 = vld [vmem:[%s1 + $0x1bc] sm:$0xf]
  %v157 = vld [vmem:[%s1 + $0x1c0] sm:$0xf]
  %v158 = vld [vmem:[%s1 + $0x1c4] sm:$0xf]
  %v159 = vld [vmem:[%s1 + $0x1c8] sm:$0xf]
  %v160 = vld [vmem:[%s1 + $0x1cc] sm:$0xf]
  %v161 = vld [vmem:[%s1 + $0x1d0] sm:$0xf]
  %v162 = vld [vmem:[%s1 + $0x1d4] sm:$0xf]
  %v163 = vld [vmem:[%s1 + $0x1d8] sm:$0xf]
  %v164 = vld [vmem:[%s1 + $0x1dc] sm:$0xf]
  %v165 = vld [vmem:[%s1 + $0x1e0] sm:$0xf]
  %v166 = vld [vmem:[%s1 + $0x1e4] sm:$0xf]
  %v167 = vld [vmem:[%s1 + $0x1e8] sm:$0xf]
  %v168 = vld [vmem:[%s1 + $0x1ec] sm:$0xf]
  %v169 = vld [vmem:[%s1 + $0x1f0] sm:$0xf]
  %v170 = vld [vmem:[%s1 + $0x1f4] sm:$0xf]
  %v171 = vld [vmem:[%s1 + $0x1f8] sm:$0xf]
  %v172 = vld [vmem:[%s1 + $0x1fc] sm:$0xf]
  %v173 = vld [vmem:[%s2] sm:$0x1]
  %v175 = vperm.slane %v173, 0
  %v305 = vunpack.c.l.b16 %v45
  %v306 = vunpack.c.l.b16 %v46
  %v307 = vunpack.c.l.b16 %v47
  %v308 = vunpack.c.l.b16 %v48
  %v309 = vunpack.c.l.b16 %v49
  %v310 = vunpack.c.l.b16 %v50
  %v311 = vunpack.c.l.b16 %v51
  %v312 = vunpack.c.l.b16 %v52
  %v313 = vunpack.c.l.b16 %v53
  %v314 = vunpack.c.l.b16 %v54
  %v315 = vunpack.c.l.b16 %v55
  %v316 = vunpack.c.l.b16 %v56
  %v317 = vunpack.c.l.b16 %v57
  %v318 = vunpack.c.l.b16 %v58
  %v319 = vunpack.c.l.b16 %v59
  %v320 = vunpack.c.l.b16 %v60
  %v321 = vunpack.c.l.b16 %v61
  %v322 = vunpack.c.l.b16 %v62
  %v323 = vunpack.c.l.b16 %v63
  %v324 = vunpack.c.l.b16 %v64
  %v325 = vunpack.c.l.b16 %v65
  %v326 = vunpack.c.l.b16 %v66
  %v327 = vunpack.c.l.b16 %v67
  %v328 = vunpack.c.l.b16 %v68
  %v329 = vunpack.c.l.b16 %v69
  %v330 = vunpack.c.l.b16 %v70
  %v331 = vunpack.c.l.b16 %v71
  %v332 = vunpack.c.l.b16 %v72
  %v333 = vunpack.c.l.b16 %v73
  %v334 = vunpack.c.l.b16 %v74
  %v335 = vunpack.c.l.b16 %v75
  %v336 = vunpack.c.l.b16 %v76
  %v337 = vunpack.c.l.b16 %v77
  %v338 = vunpack.c.l.b16 %v78
  %v339 = vunpack.c.l.b16 %v79
  %v340 = vunpack.c.l.b16 %v80
  %v341 = vunpack.c.l.b16 %v81
  %v342 = vunpack.c.l.b16 %v82
  %v343 = vunpack.c.l.b16 %v83
  %v344 = vunpack.c.l.b16 %v84
  %v345 = vunpack.c.l.b16 %v85
  %v346 = vunpack.c.l.b16 %v86
  %v347 = vunpack.c.l.b16 %v87
  %v348 = vunpack.c.l.b16 %v88
  %v349 = vunpack.c.l.b16 %v89
  %v350 = vunpack.c.l.b16 %v90
  %v351 = vunpack.c.l.b16 %v91
  %v352 = vunpack.c.l.b16 %v92
  %v353 = vunpack.c.l.b16 %v93
  %v354 = vunpack.c.l.b16 %v94
  %v355 = vunpack.c.l.b16 %v95
  %v356 = vunpack.c.l.b16 %v96
  %v357 = vunpack.c.l.b16 %v97
  %v358 = vunpack.c.l.b16 %v98
  %v359 = vunpack.c.l.b16 %v99
  %v360 = vunpack.c.l.b16 %v100
  %v361 = vunpack.c.l.b16 %v101
  %v362 = vunpack.c.l.b16 %v102
  %v363 = vunpack.c.l.b16 %v103
  %v364 = vunpack.c.l.b16 %v104
  %v365 = vunpack.c.l.b16 %v105
  %v366 = vunpack.c.l.b16 %v106
  %v367 = vunpack.c.l.b16 %v107
  %v368 = vunpack.c.l.b16 %v108
  %v369 = vunpack.c.l.b16 %v109
  %v370 = vunpack.c.l.b16 %v110
  %v371 = vunpack.c.l.b16 %v111
  %v372 = vunpack.c.l.b16 %v112
  %v373 = vunpack.c.l.b16 %v113
  %v374 = vunpack.c.l.b16 %v114
  %v375 = vunpack.c.l.b16 %v115
  %v376 = vunpack.c.l.b16 %v116
  %v377 = vunpack.c.l.b16 %v117
  %v378 = vunpack.c.l.b16 %v118
  %v379 = vunpack.c.l.b16 %v119
  %v380 = vunpack.c.l.b16 %v120
  %v381 = vunpack.c.l.b16 %v121
  %v382 = vunpack.c.l.b16 %v122
  %v383 = vunpack.c.l.b16 %v123
  %v384 = vunpack.c.l.b16 %v124
  %v385 = vunpack.c.l.b16 %v125
  %v386 = vunpack.c.l.b16 %v126
  %v387 = vunpack.c.l.b16 %v127
  %v388 = vunpack.c.l.b16 %v128
  %v389 = vunpack.c.l.b16 %v129
  %v390 = vunpack.c.l.b16 %v130
  %v391 = vunpack.c.l.b16 %v131
  %v392 = vunpack.c.l.b16 %v132
  %v393 = vunpack.c.l.b16 %v133
  %v394 = vunpack.c.l.b16 %v134
  %v395 = vunpack.c.l.b16 %v135
  %v396 = vunpack.c.l.b16 %v136
  %v397 = vunpack.c.l.b16 %v137
  %v398 = vunpack.c.l.b16 %v138
  %v399 = vunpack.c.l.b16 %v139
  %v400 = vunpack.c.l.b16 %v140
  %v401 = vunpack.c.l.b16 %v141
  %v402 = vunpack.c.l.b16 %v142
  %v403 = vunpack.c.l.b16 %v143
  %v404 = vunpack.c.l.b16 %v144
  %v405 = vunpack.c.l.b16 %v145
  %v406 = vunpack.c.l.b16 %v146
  %v407 = vunpack.c.l.b16 %v147
  %v408 = vunpack.c.l.b16 %v148
  %v409 = vunpack.c.l.b16 %v149
  %v410 = vunpack.c.l.b16 %v150
  %v411 = vunpack.c.l.b16 %v151
  %v412 = vunpack.c.l.b16 %v152
  %v413 = vunpack.c.l.b16 %v153
  %v414 = vunpack.c.l.b16 %v154
  %v415 = vunpack.c.l.b16 %v155
  %v416 = vunpack.c.l.b16 %v156
  %v417 = vunpack.c.l.b16 %v157
  %v418 = vunpack.c.l.b16 %v158
  %v419 = vunpack.c.l.b16 %v159
  %v420 = vunpack.c.l.b16 %v160
  %v421 = vunpack.c.l.b16 %v161
  %v422 = vunpack.c.l.b16 %v162
  %v423 = vunpack.c.l.b16 %v163
  %v424 = vunpack.c.l.b16 %v164
  %v425 = vunpack.c.l.b16 %v165
  %v426 = vunpack.c.l.b16 %v166
  %v427 = vunpack.c.l.b16 %v167
  %v428 = vunpack.c.l.b16 %v168
  %v429 = vunpack.c.l.b16 %v169
  %v430 = vunpack.c.l.b16 %v170
  %v431 = vunpack.c.l.b16 %v171
  %v432 = vunpack.c.l.b16 %v172
  %v433 = vpack.c.b16 %v306, %v305
  %v434 = vpack.c.b16 %v308, %v307
  %v435 = vpack.c.b16 %v310, %v309
  %v436 = vpack.c.b16 %v312, %v311
  %v437 = vpack.c.b16 %v314, %v313
  %v438 = vpack.c.b16 %v316, %v315
  %v439 = vpack.c.b16 %v318, %v317
  %v440 = vpack.c.b16 %v320, %v319
  %v441 = vpack.c.b16 %v322, %v321
  %v442 = vpack.c.b16 %v324, %v323
  %v443 = vpack.c.b16 %v326, %v325
  %v444 = vpack.c.b16 %v328, %v327
  %v445 = vpack.c.b16 %v330, %v329
  %v446 = vpack.c.b16 %v332, %v331
  %v447 = vpack.c.b16 %v334, %v333
  %v448 = vpack.c.b16 %v336, %v335
  %v449 = vpack.c.b16 %v338, %v337
  %v450 = vpack.c.b16 %v340, %v339
  %v451 = vpack.c.b16 %v342, %v341
  %v452 = vpack.c.b16 %v344, %v343
  %v453 = vpack.c.b16 %v346, %v345
  %v454 = vpack.c.b16 %v348, %v347
  %v455 = vpack.c.b16 %v350, %v349
  %v456 = vpack.c.b16 %v352, %v351
  %v457 = vpack.c.b16 %v354, %v353
  %v458 = vpack.c.b16 %v356, %v355
  %v459 = vpack.c.b16 %v358, %v357
  %v460 = vpack.c.b16 %v360, %v359
  %v461 = vpack.c.b16 %v362, %v361
  %v462 = vpack.c.b16 %v364, %v363
  %v463 = vpack.c.b16 %v366, %v365
  %v464 = vpack.c.b16 %v368, %v367
  %v465 = vpack.c.b16 %v370, %v369
  %v466 = vpack.c.b16 %v372, %v371
  %v467 = vpack.c.b16 %v374, %v373
  %v468 = vpack.c.b16 %v376, %v375
  %v469 = vpack.c.b16 %v378, %v377
  %v470 = vpack.c.b16 %v380, %v379
  %v471 = vpack.c.b16 %v382, %v381
  %v472 = vpack.c.b16 %v384, %v383
  %v473 = vpack.c.b16 %v386, %v385
  %v474 = vpack.c.b16 %v388, %v387
  %v475 = vpack.c.b16 %v390, %v389
  %v476 = vpack.c.b16 %v392, %v391
  %v477 = vpack.c.b16 %v394, %v393
  %v478 = vpack.c.b16 %v396, %v395
  %v479 = vpack.c.b16 %v398, %v397
  %v480 = vpack.c.b16 %v400, %v399
  %v481 = vpack.c.b16 %v402, %v401
  %v482 = vpack.c.b16 %v404, %v403
  %v483 = vpack.c.b16 %v406, %v405
  %v484 = vpack.c.b16 %v408, %v407
  %v485 = vpack.c.b16 %v410, %v409
  %v486 = vpack.c.b16 %v412, %v411
  %v487 = vpack.c.b16 %v414, %v413
  %v488 = vpack.c.b16 %v416, %v415
  %v489 = vpack.c.b16 %v418, %v417
  %v490 = vpack.c.b16 %v420, %v419
  %v491 = vpack.c.b16 %v422, %v421
  %v492 = vpack.c.b16 %v424, %v423
  %v493 = vpack.c.b16 %v426, %v425
  %v494 = vpack.c.b16 %v428, %v427
  %v495 = vpack.c.b16 %v430, %v429
  %v496 = vpack.c.b16 %v432, %v431
  %561 = vmatpush.bf16.msra.mxu0 %v440
  %562 = vmatpush.bf16.msra.mxu0 %v439
  %563 = vmatpush.bf16.msra.mxu0 %v438
  %564 = vmatpush.bf16.msra.mxu0 %v437
  %565 = vmatpush.bf16.msra.mxu0 %v436
  %566 = vmatpush.bf16.msra.mxu0 %v435
  %567 = vmatpush.bf16.msra.mxu0 %v434
  %568 = vmatpush.bf16.msra.mxu0 %v433
  %569 = vmatmul.bf16.gmra.mxu0 %v37
  %v570 = vpop.f32.mrf.mxu0
  %v571 = vadd.f32 %v175, %v570
  %v572 = vpop.f32.mrf.mxu0
  %573 = vdwg.mxu0
  %574 = vmatpush.bf16.msra.mxu0 %v448
  %575 = vmatpush.bf16.msra.mxu0 %v447
  %576 = vmatpush.bf16.msra.mxu0 %v446
  %577 = vmatpush.bf16.msra.mxu0 %v445
  %578 = vmatpush.bf16.msra.mxu0 %v444
  %579 = vmatpush.bf16.msra.mxu0 %v443
  %580 = vmatpush.bf16.msra.mxu0 %v442
  %581 = vmatpush.bf16.msra.mxu0 %v441
  %582 = vmatmul.bf16.gmra.mxu0 %v38
  %v583 = vpop.f32.mrf.mxu0
  %v584 = vadd.f32 %v571, %v583
  %v585 = vpop.f32.mrf.mxu0
  %586 = vdwg.mxu0
  %587 = vmatpush.bf16.msra.mxu0 %v456
  %588 = vmatpush.bf16.msra.mxu0 %v455
  %589 = vmatpush.bf16.msra.mxu0 %v454
  %590 = vmatpush.bf16.msra.mxu0 %v453
  %591 = vmatpush.bf16.msra.mxu0 %v452
  %592 = vmatpush.bf16.msra.mxu0 %v451
  %593 = vmatpush.bf16.msra.mxu0 %v450
  %594 = vmatpush.bf16.msra.mxu0 %v449
  %595 = vmatmul.bf16.gmra.mxu0 %v39
  %v596 = vpop.f32.mrf.mxu0
  %v597 = vadd.f32 %v584, %v596
  %v598 = vpop.f32.mrf.mxu0
  %599 = vdwg.mxu0
  %600 = vmatpush.bf16.msra.mxu0 %v464
  %601 = vmatpush.bf16.msra.mxu0 %v463
  %602 = vmatpush.bf16.msra.mxu0 %v462
  %603 = vmatpush.bf16.msra.mxu0 %v461
  %604 = vmatpush.bf16.msra.mxu0 %v460
  %605 = vmatpush.bf16.msra.mxu0 %v459
  %606 = vmatpush.bf16.msra.mxu0 %v458
  %607 = vmatpush.bf16.msra.mxu0 %v457
  %608 = vmatmul.bf16.gmra.mxu0 %v40
  %v609 = vpop.f32.mrf.mxu0
  %v610 = vadd.f32 %v597, %v609
  %v611 = vpop.f32.mrf.mxu0
  %612 = vdwg.mxu0
  %613 = vmatpush.bf16.msra.mxu0 %v472
  %614 = vmatpush.bf16.msra.mxu0 %v471
  %615 = vmatpush.bf16.msra.mxu0 %v470
  %616 = vmatpush.bf16.msra.mxu0 %v469
  %617 = vmatpush.bf16.msra.mxu0 %v468
  %618 = vmatpush.bf16.msra.mxu0 %v467
  %619 = vmatpush.bf16.msra.mxu0 %v466
  %620 = vmatpush.bf16.msra.mxu0 %v465
  %621 = vmatmul.bf16.gmra.mxu0 %v41
  %v622 = vpop.f32.mrf.mxu0
  %v623 = vadd.f32 %v610, %v622
  %v624 = vpop.f32.mrf.mxu0
  %625 = vdwg.mxu0
  %626 = vmatpush.bf16.msra.mxu0 %v480
  %627 = vmatpush.bf16.msra.mxu0 %v479
  %628 = vmatpush.bf16.msra.mxu0 %v478
  %629 = vmatpush.bf16.msra.mxu0 %v477
  %630 = vmatpush.bf16.msra.mxu0 %v476
  %631 = vmatpush.bf16.msra.mxu0 %v475
  %632 = vmatpush.bf16.msra.mxu0 %v474
  %633 = vmatpush.bf16.msra.mxu0 %v473
  %634 = vmatmul.bf16.gmra.mxu0 %v42
  %v635 = vpop.f32.mrf.mxu0
  %v636 = vadd.f32 %v623, %v635
  %v637 = vpop.f32.mrf.mxu0
  %638 = vdwg.mxu0
  %639 = vmatpush.bf16.msra.mxu0 %v488
  %640 = vmatpush.bf16.msra.mxu0 %v487
  %641 = vmatpush.bf16.msra.mxu0 %v486
  %642 = vmatpush.bf16.msra.mxu0 %v485
  %643 = vmatpush.bf16.msra.mxu0 %v484
  %644 = vmatpush.bf16.msra.mxu0 %v483
  %645 = vmatpush.bf16.msra.mxu0 %v482
  %646 = vmatpush.bf16.msra.mxu0 %v481
  %647 = vmatmul.bf16.gmra.mxu0 %v43
  %v648 = vpop.f32.mrf.mxu0
  %v649 = vadd.f32 %v636, %v648
  %v650 = vpop.f32.mrf.mxu0
  %651 = vdwg.mxu0
  %652 = vmatpush.bf16.msra.mxu0 %v496
  %653 = vmatpush.bf16.msra.mxu0 %v495
  %654 = vmatpush.bf16.msra.mxu0 %v494
  %655 = vmatpush.bf16.msra.mxu0 %v493
  %656 = vmatpush.bf16.msra.mxu0 %v492
  %657 = vmatpush.bf16.msra.mxu0 %v491
  %658 = vmatpush.bf16.msra.mxu0 %v490
  %659 = vmatpush.bf16.msra.mxu0 %v489
  %660 = vmatmul.bf16.gmra.mxu0 %v44
  %v661 = vpop.f32.mrf.mxu0
  %v662 = vadd.f32 %v649, %v661
  %v663 = vpop.f32.mrf.mxu0
  %664 = vdwg.mxu0
  %vm665 = vcmask 58368
  %666 = vst.msk [vmem:[%s3] sm:$0x3] %vm665, %v662
  // Predicated region
  $region14: #{roi_forward.1} parent=0 // pred_check
    _
  $region15: #{roi_forward.1} parent=0 // pred_check_branch
    %668 = sbr.rel (0) target = $region17
  $region16: #{roi_forward.1} parent=0 // pred_region
    _
  $region17: #{roi_forward.1} parent=0 // pred_fallthru
    _
  // Predicated region
  $region18: #{roi_forward.1} parent=0 // pred_check
    _
  $region19: #{roi_forward.1} parent=0 // pred_check_branch
    %670 = sbr.rel (0) target = $region21
  $region20: #{roi_forward.1} parent=0 // pred_region
    _
  $region21: #{roi_forward.1} parent=0 // pred_fallthru
    _

</llo_original>
